<compile_context>
chip_gen: v5e
topology: v5e:2x2
jax: 0.10.0
libtpu: 0.0.40
codegen_flags: <defaults>
</compile_context>

<pallas_src>
import jax
import jax.numpy as jnp
from jax.experimental import pallas as pl
from jax.experimental.pallas import tpu as pltpu


def add_self_kernel(x_ref, o_ref):
    # hot path: single load, one VPU add, single store
    v = x_ref[...]
    o_ref[...] = v + v


_SMALL_BYTES = 512 * 1024          # below this, grid/pipeline overhead dominates
_TARGET_BLOCK_BYTES = 2 * 1024 * 1024   # ~2 MiB blocks: >=85% of HBM roofline
_LANE_CANDIDATES = (2048, 1024, 512, 256, 128)


def _add_single_block(x):
    """One full-array VMEM block (for small inputs only)."""
    return pl.pallas_call(
        add_self_kernel,
        out_shape=jax.ShapeDtypeStruct(x.shape, x.dtype),
        in_specs=[pl.BlockSpec(memory_space=pltpu.VMEM)],
        out_specs=pl.BlockSpec(memory_space=pltpu.VMEM),
    )(x)


def aten_add(x):
    """Computes x + x with a Pallas TPU kernel. Accepts any shape/dtype."""
    orig_shape = x.shape
    n = x.size
    if n == 0:
        return x

    itemsize = x.dtype.itemsize
    total_bytes = n * itemsize

    # --- small path: no grid, single VMEM block -------------------------
    if total_bytes <= _SMALL_BYTES:
        if n % 128 == 0:
            # present a lane-dense 2D view even for the single block
            y = _add_single_block(x.reshape(n // 128, 128))
            return y.reshape(orig_shape)
        return _add_single_block(x)

    # --- large path: lane-dense 2D view + multi-MiB pipelined blocks ----
    # Pick the widest lane dimension that divides n; otherwise pad.
    C = _LANE_CANDIDATES[0]
    for cand in _LANE_CANDIDATES:
        if n % cand == 0:
            C = cand
            break

    flat = x.reshape(-1)
    pad = (-n) % C
    if pad:
        flat = jnp.pad(flat, (0, pad))
    rows = flat.size // C
    x2d = flat.reshape(rows, C)

    # ~2 MiB blocks; tile_rows multiple of 32 => valid sublane tiling for
    # f32 (8), bf16 (16) and int8 (32).
    tile_rows = max(32, (_TARGET_BLOCK_BYTES // (C * itemsize)) // 32 * 32)
    if tile_rows >= rows:
        tile_rows = rows  # full-extent block along rows is always legal

    grid = (pl.cdiv(rows, tile_rows),)   # partial last block handled by Pallas

    out2d = pl.pallas_call(
        add_self_kernel,
        out_shape=jax.ShapeDtypeStruct(x2d.shape, x2d.dtype),
        grid_spec=pltpu.PrefetchScalarGridSpec(
            num_scalar_prefetch=0,
            grid=grid,
            in_specs=[pl.BlockSpec((tile_rows, C), lambda i: (i, 0))],
            out_specs=pl.BlockSpec((tile_rows, C), lambda i: (i, 0)),
        ),
        compiler_params=pltpu.CompilerParams(
            dimension_semantics=("parallel",),       # shards over v7x's 2 TCs
            vmem_limit_bytes=32 * 1024 * 1024,       # headroom for 4x block bytes
        ),
    )(x2d)

    out_flat = out2d.reshape(-1)
    if pad:
        out_flat = out_flat[:n]
    return out_flat.reshape(orig_shape)


if __name__ == "__main__":
    key = jax.random.PRNGKey(0)

    # Primary test: small shape consistent with the elementwise module.
    x_small = jax.random.normal(key, (2, 4, 16, 16), dtype=jnp.float32)
    y_small = aten_add(x_small)
    jax.block_until_ready(y_small)
    ref_small = x_small + x_small
    assert y_small.shape == ref_small.shape and y_small.dtype == ref_small.dtype
    assert jnp.array_equal(y_small, ref_small)

    # Secondary check: exercise the large pipelined grid path (2 parallel steps).
    x_large = jax.random.normal(key, (512, 2048), dtype=jnp.float32)
    y_large = aten_add(x_large)
    jax.block_until_ready(y_large)
    ref_large = x_large + x_large
    assert y_large.shape == ref_large.shape and y_large.dtype == ref_large.dtype
    assert jnp.array_equal(y_large, ref_large)

    print("KERNEL_OK")
</pallas_src>

<mosaic_0001>
module attributes {stable_mosaic.version = 11 : i64} {
  func.func @add_self_kernel(%arg0: memref<16x128xf32, #tpu.memory_space<vmem>>, %arg1: memref<16x128xf32, #tpu.memory_space<vmem>>) attributes {dimension_semantics = [], scalar_prefetch = 0 : i64, scratch_operands = 0 : i64, tpu.core_type = #tpu.core_type<tc>} {
    %c0 = arith.constant 0 : index
    %c0_0 = arith.constant 0 : index
    %0 = vector.load %arg0[%c0, %c0_0] : memref<16x128xf32, #tpu.memory_space<vmem>>, vector<16x128xf32>
    %1 = arith.addf %0, %0 : vector<16x128xf32>
    %c0_1 = arith.constant 0 : index
    %c0_2 = arith.constant 0 : index
    %2 = vector.load %arg1[%c0_1, %c0_2] : memref<16x128xf32, #tpu.memory_space<vmem>>, vector<16x128xf32>
    tpu.vector_store %arg1[%c0_1, %c0_2], %1 {strides = array<i32>} : memref<16x128xf32, #tpu.memory_space<vmem>>, vector<16x128xf32>,
    return
  }
}

</mosaic_0001>

<llo_original>
// kernel: tpu_custom_call.1
$region0: #{tpu_custom_call.1}
  #allocation0 [shape = 'u32[]', space=smem, size = 0x4, offset = 0x4, fixed_abs, tag = 'smem constant byte address 0x4 - core index']
  #allocation1 [shape = 'u32[72,128]{1,0:T(1,128)}', space=vmem, size = 0x9000, scoped, tag = 'internal scratch']
  %s0 = inlined_call_operand.hbm [shape: f32[16,128], index: 0, kind: input, shape index: {}]
  %s1 = inlined_call_operand.hbm [shape: f32[16,128], index: 1, kind: output, shape index: {}]
  %s2 = sld [smem:[#allocation0]]
  $region18: #{tpu_custom_call.1} parent=0
    _
  %s4 = ssub.s32 1, %s2
  %s5 = scalar_select 0, %s4, %s2
  $region1: #{tpu_custom_call.1} parent=0
    #allocation2 [shape = 'u8[8192]{0}', space=vmem, size = 0x2000, scoped, tag = 'input window, operand 0, single buffered']
    #allocation3 [shape = 's32[1]{0}', space=sflag, size = 0x4, scoped, tag = 'scoped memory for tpu_custom_call.1']
    #allocation4 [shape = 's32[1]{0}', space=sflag, size = 0x4, scoped, tag = 'scoped memory for tpu_custom_call.1']
    #allocation5 [shape = 'u8[8192]{0}', space=vmem, size = 0x2000, scoped, tag = 'output window, operand 0, single buffered']
    %6 = vsyncpa [#allocation3], 0
    %7 = vsyncpa [#allocation4], 0
    // Predicated region
    $region2: #{tpu_custom_call.1} parent=1 // pred_check
      _
    $region3: #{tpu_custom_call.1} parent=1 // pred_check_branch
      %9 = sbr.rel (0) target = $region5
    $region4: #{tpu_custom_call.1} parent=1 // pred_region
      %11 = vsyncadd [#allocation3], 0
      %s12 = sshll.u32 %s0, 4
      %s13 = int_to_ptr.hbm [resolvable:$true] %s12
      %s14 = sshll.u32 [#allocation2], 4
      %s15 = int_to_ptr.vmem [resolvable:$true] %s14
      %20 = dma.hbm_to_vmem [thread:$0]  %s13, 256, %s15, [#allocation3], 128, 128, 8
    $region5: #{tpu_custom_call.1} parent=1 // pred_fallthru
      _
    // Predicated region
    $region6: #{tpu_custom_call.1} parent=1 // pred_check
      _
    $region7: #{tpu_custom_call.1} parent=1 // pred_check_branch
      %22 = sbr.rel (0) target = $region9
    $region8: #{tpu_custom_call.1} parent=1 // pred_region
      %24 = dma.done [#allocation3], 256
    $region9: #{tpu_custom_call.1} parent=1 // pred_fallthru
      _
    %v25 = vld [vmem:[#allocation2] sm:$0xff]
    %v26 = vld [vmem:[#allocation2 + $0x8] sm:$0xff]
    %v27 = vadd.f32 %v25, %v25
    %v28 = vadd.f32 %v26, %v26
    %29 = vst [vmem:[#allocation5] sm:$0xff] %v27
    %30 = vst [vmem:[#allocation5 + $0x8] sm:$0xff] %v28
    // Predicated region
    $region10: #{tpu_custom_call.1} parent=1 // pred_check
      _
    $region11: #{tpu_custom_call.1} parent=1 // pred_check_branch
      %32 = sbr.rel (0) target = $region13
    $region12: #{tpu_custom_call.1} parent=1 // pred_region
      %34 = vsyncadd [#allocation4], 0
      %s35 = sshll.u32 [#allocation5], 4
      %s36 = int_to_ptr.vmem [resolvable:$true] %s35
      %s37 = sshll.u32 %s1, 4
      %s38 = int_to_ptr.hbm [resolvable:$true] %s37
      %43 = dma.vmem_to_hbm [thread:$0]  %s36, 256, %s38, [#allocation4], 128, 128, 8
    $region13: #{tpu_custom_call.1} parent=1 // pred_fallthru
      _
    // Predicated region
    $region14: #{tpu_custom_call.1} parent=1 // pred_check
      _
    $region15: #{tpu_custom_call.1} parent=1 // pred_check_branch
      %45 = sbr.rel (0) target = $region17
    $region16: #{tpu_custom_call.1} parent=1 // pred_region
      %47 = dma.done [#allocation4], 256
    $region17: #{tpu_custom_call.1} parent=1 // pred_fallthru
      _
    %48 = vsyncpa [#allocation3], 1
    %49 = vsyncpa [#allocation4], 1

</llo_original>
